<compile_context>
chip_gen: v7x
topology: tpu7x:2x2x1
jax: 0.10.0
libtpu: 0.0.40
codegen_flags: <defaults>
</compile_context>

<pallas_src>
import jax
import jax.numpy as jnp
from jax import lax
from jax.experimental import pallas as pl
from jax.experimental.pallas import tpu as pltpu

# --- module constants (from Model_architecture.py) -------------------------
PARAM_HIDDEN = 128          # param_hidden
N_LABEL = 3                 # len(['IDH-1', 'IDH-2', 'IDHTN'])
N_SUB = 8                   # label rows padded to a sublane multiple
TILE_M = 1024               # rows of x per grid step (multiple of 8 / of 128)


# --- Pallas kernel: o = W @ x.T + b  (transposed, lane-dense output) --------
def _linear_kernel(x_ref, w_ref, b_ref, o_ref):
    # x_ref: (TILE_M, H)   w_ref: (N_SUB, H)   b_ref: (N_SUB, 1)
    # o_ref: (N_SUB, TILE_M)  -- M on the lane axis, fully lane-dense stores.
    acc = lax.dot_general(
        w_ref[...], x_ref[...],
        dimension_numbers=(((1,), (1,)), ((), ())),   # contract H with H
        preferred_element_type=jnp.float32,
    )
    o_ref[...] = (acc + b_ref[...]).astype(o_ref.dtype)


def prepare_params(weight, bias):
    """Pre-bake padded params once (not per forward call).

    weight: (n_label, hidden) as in nn.Linear;  bias: (n_label,).
    Returns (w_pad: (N_SUB, hidden) f32, b_pad: (N_SUB, 1) f32).
    """
    n_label, hidden = weight.shape
    assert hidden == PARAM_HIDDEN and n_label == N_LABEL
    w_pad = jnp.zeros((N_SUB, hidden), jnp.float32).at[:N_LABEL].set(
        weight.astype(jnp.float32))
    b_pad = jnp.zeros((N_SUB, 1), jnp.float32).at[:N_LABEL, 0].set(
        bias.astype(jnp.float32))
    return w_pad, b_pad


def modifier_classification_forward(x, w_pad, b_pad, x_meta=None):
    """Equivalent to `self.classifier(x)` (x_meta ignored, as in PyTorch)."""
    orig_shape = x.shape
    hidden = orig_shape[-1]
    assert hidden == PARAM_HIDDEN

    # nn.Linear acts on the last axis: flatten leading dims into M.
    x2d = x.reshape(-1, hidden)
    m = x2d.shape[0]

    grid_m = pl.cdiv(m, TILE_M)

    out_t = pl.pallas_call(
        _linear_kernel,
        out_shape=jax.ShapeDtypeStruct((N_SUB, m), jnp.float32),
        grid_spec=pltpu.PrefetchScalarGridSpec(
            num_scalar_prefetch=0,
            grid=(grid_m,),
            in_specs=[
                # x tiles stream through the pipeline (double-buffered).
                pl.BlockSpec((TILE_M, hidden), lambda i: (i, 0)),
                # weight / bias stay resident (same block every step).
                pl.BlockSpec((N_SUB, hidden), lambda i: (0, 0)),
                pl.BlockSpec((N_SUB, 1), lambda i: (0, 0)),
            ],
            out_specs=pl.BlockSpec((N_SUB, TILE_M), lambda i: (0, i)),
        ),
        compiler_params=pltpu.CompilerParams(
            dimension_semantics=("parallel",),   # shard M across v7x cores
        ),
    )(x2d, w_pad, b_pad)

    # (N_SUB, M) -> (M, n_label), then restore leading dims.
    out = out_t[:N_LABEL, :].T
    return out.reshape(orig_shape[:-1] + (N_LABEL,))


def init_params(key, hidden=PARAM_HIDDEN, n_label=N_LABEL):
    """Deterministic init mirroring nn.Linear default: U(-1/sqrt(fan_in), +)."""
    kw, kb = jax.random.split(key)
    bound = 1.0 / jnp.sqrt(float(hidden))
    weight = jax.random.uniform(kw, (n_label, hidden), jnp.float32, -bound, bound)
    bias = jax.random.uniform(kb, (n_label,), jnp.float32, -bound, bound)
    return weight, bias


if __name__ == "__main__":
    key = jax.random.PRNGKey(0)
    k_x, k_p = jax.random.split(key)

    # Small shapes consistent with the module: (batch=2, seq=8, hidden=128).
    x = jax.random.normal(k_x, (2, 8, PARAM_HIDDEN), dtype=jnp.float32)
    weight, bias = init_params(k_p)
    w_pad, b_pad = prepare_params(weight, bias)

    y = modifier_classification_forward(x, w_pad, b_pad)
    y = jax.block_until_ready(y)

    # Reference check against plain JAX (same math as nn.Linear).
    y_ref = x @ weight.T + bias
    assert y.shape == (2, 8, N_LABEL)
    assert jnp.allclose(y, y_ref, atol=1e-5, rtol=1e-5)

    print("KERNEL_OK")
</pallas_src>

<mosaic_0001>
module attributes {stable_mosaic.version = 11 : i64} {
  func.func @_linear_kernel(%arg0: i32, %arg1: memref<1024x128xf32, #tpu.memory_space<vmem>>, %arg2: memref<8x128xf32, #tpu.memory_space<vmem>>, %arg3: memref<8x1xf32, #tpu.memory_space<vmem>>, %arg4: memref<8x1024xf32, #tpu.memory_space<vmem>>) attributes {dimension_semantics = [#tpu.dimension_semantics<parallel>], iteration_bounds = array<i64: 1>, scalar_prefetch = 0 : i64, scratch_operands = 0 : i64, tpu.core_type = #tpu.core_type<tc>, window_params = [{transform_indices = @transform_0, window_bounds = array<i64: 1024, 128>}, {pipeline_mode = #tpu.pipeline_mode<synchronous>, transform_indices = @transform_1, window_bounds = array<i64: 8, 128>}, {pipeline_mode = #tpu.pipeline_mode<synchronous>, transform_indices = @transform_2, window_bounds = array<i64: 8, 1>}, {transform_indices = @transform_3, window_bounds = array<i64: 8, 1024>}]} {
    %c0 = arith.constant 0 : index
    %c0_0 = arith.constant 0 : index
    %0 = vector.load %arg2[%c0, %c0_0] : memref<8x128xf32, #tpu.memory_space<vmem>>, vector<8x128xf32>
    %c0_1 = arith.constant 0 : index
    %c0_2 = arith.constant 0 : index
    %1 = vector.load %arg1[%c0_1, %c0_2] : memref<1024x128xf32, #tpu.memory_space<vmem>>, vector<1024x128xf32>
    %cst = arith.constant dense<0.000000e+00> : vector<8x1024xf32>
    %2 = tpu.matmul %0, %1, %cst {dimension_numbers = #tpu.dot_dimension_numbers<[1], [1], [0], [0], [0, 0, 1, 0], [], []>} : vector<8x128xf32>, vector<1024x128xf32>, vector<8x1024xf32> -> vector<8x1024xf32>
    %c0_3 = arith.constant 0 : index
    %c0_4 = arith.constant 0 : index
    %3 = vector.load %arg3[%c0_3, %c0_4] : memref<8x1xf32, #tpu.memory_space<vmem>>, vector<8x1xf32>
    %4 = vector.broadcast %3 : vector<8x1xf32> to vector<8x1024xf32>
    %5 = arith.addf %2, %4 : vector<8x1024xf32>
    %c0_5 = arith.constant 0 : index
    %c0_6 = arith.constant 0 : index
    %6 = vector.load %arg4[%c0_5, %c0_6] : memref<8x1024xf32, #tpu.memory_space<vmem>>, vector<8x1024xf32>
    tpu.vector_store %arg4[%c0_5, %c0_6], %5 {strides = array<i32>} : memref<8x1024xf32, #tpu.memory_space<vmem>>, vector<8x1024xf32>,
    return
  }
  func.func @transform_0(%arg0: i32) -> (i32, i32) {
    %c0_i32 = arith.constant 0 : i32
    %c0_i32_0 = arith.constant 0 : i32
    return %arg0, %c0_i32 : i32, i32
  }
  func.func @transform_1(%arg0: i32) -> (i32, i32) {
    %c0_i32 = arith.constant 0 : i32
    %c0_i32_0 = arith.constant 0 : i32
    %c0_i32_1 = arith.constant 0 : i32
    return %c0_i32, %c0_i32_0 : i32, i32
  }
  func.func @transform_2(%arg0: i32) -> (i32, i32) {
    %c0_i32 = arith.constant 0 : i32
    %c0_i32_0 = arith.constant 0 : i32
    %c0_i32_1 = arith.constant 0 : i32
    return %c0_i32, %c0_i32_0 : i32, i32
  }
  func.func @transform_3(%arg0: i32) -> (i32, i32) {
    %c0_i32 = arith.constant 0 : i32
    %c0_i32_0 = arith.constant 0 : i32
    return %c0_i32, %arg0 : i32, i32
  }
}

</mosaic_0001>

<llo_original>
// kernel: tpu_custom_call.1
$region0: #{tpu_custom_call.1}
  #allocation0 [shape = 'u32[]', space=smem, size = 0x4, offset = 0x4, fixed_abs, tag = 'smem constant byte address 0x4 - core index']
  #allocation1 [shape = 'u32[144,128]{1,0:T(1,128)}', space=vmem, size = 0x12000, scoped, tag = 'internal scratch']
  %s0 = inlined_call_operand.hbm [shape: f32[16,128], index: 0, kind: input, shape index: {}]
  %s1 = inlined_call_operand.vmem [shape: f32[8,128], index: 1, kind: input, shape index: {}]
  %s2 = inlined_call_operand.vmem [shape: f32[8,1], index: 2, kind: input, shape index: {}]
  %s3 = inlined_call_operand.hbm [shape: f32[8,16], index: 3, kind: output, shape index: {}]
  %s4 = sld [smem:[#allocation0]]
  $region26: #{tpu_custom_call.1} parent=0
    _
  %s6 = ssub.s32 1, %s4
  %s7 = scalar_select 0, %s6, %s4
  $region1: #{tpu_custom_call.1} parent=0
    #allocation2 [shape = 'u8[524288]{0}', space=vmem, size = 0x80000, scoped, tag = 'input window, operand 0, single buffered']
    #allocation3 [shape = 's32[1]{0}', space=sflag, size = 0x4, scoped, tag = 'scoped memory for tpu_custom_call.1']
    #allocation4 [shape = 's32[1]{0}', space=sflag, size = 0x4, scoped, tag = 'scoped memory for tpu_custom_call.1']
    #allocation5 [shape = 'u8[32768]{0}', space=vmem, size = 0x8000, scoped, tag = 'output window, operand 0, single buffered']
    %8 = vsyncpa [#allocation3], 0
    %9 = vsyncpa [#allocation4], 0
    // Predicated region
    $region2: #{tpu_custom_call.1} parent=1 // pred_check
      _
    $region3: #{tpu_custom_call.1} parent=1 // pred_check_branch
      %11 = sbr.rel (0) target = $region5
    $region4: #{tpu_custom_call.1} parent=1 // pred_region
      %s13 = ssub.s32 16384, 256
      %14 = vsyncadd [#allocation3], %s13
      %s15 = sshll.u32 [#allocation2], 4
      %s16 = int_to_ptr.vmem [resolvable:$true] %s15
      %21 = dma.hbm_to_vmem [thread:$0]  %s0, 256, %s16, [#allocation3], 128, 128, 8
    $region5: #{tpu_custom_call.1} parent=1 // pred_fallthru
      _
    // Predicated region
    $region6: #{tpu_custom_call.1} parent=1 // pred_check
      _
    $region7: #{tpu_custom_call.1} parent=1 // pred_check_branch
      %23 = sbr.rel (0) target = $region9
    $region8: #{tpu_custom_call.1} parent=1 // pred_region
      _
    $region9: #{tpu_custom_call.1} parent=1 // pred_fallthru
      _
    // Predicated region
    $region10: #{tpu_custom_call.1} parent=1 // pred_check
      _
    $region11: #{tpu_custom_call.1} parent=1 // pred_check_branch
      %25 = sbr.rel (0) target = $region13
    $region12: #{tpu_custom_call.1} parent=1 // pred_region
      _
    $region13: #{tpu_custom_call.1} parent=1 // pred_fallthru
      _
    // Predicated region
    $region14: #{tpu_custom_call.1} parent=1 // pred_check
      _
    $region15: #{tpu_custom_call.1} parent=1 // pred_check_branch
      %27 = sbr.rel (0) target = $region17
    $region16: #{tpu_custom_call.1} parent=1 // pred_region
      %28 = dma.done [#allocation3], 16384
    $region17: #{tpu_custom_call.1} parent=1 // pred_fallthru
      _
    %v29 = vld [vmem:[%s1] sm:$0xff]
    %v30 = vld [vmem:[#allocation2] sm:$0xff]
    %v31 = vld [vmem:[#allocation2 + $0x8] sm:$0xff]
    %v32 = vld [vmem:[#allocation2 + $0x10] sm:$0xff]
    %v33 = vld [vmem:[#allocation2 + $0x18] sm:$0xff]
    %v34 = vld [vmem:[#allocation2 + $0x20] sm:$0xff]
    %v35 = vld [vmem:[#allocation2 + $0x28] sm:$0xff]
    %v36 = vld [vmem:[#allocation2 + $0x30] sm:$0xff]
    %v37 = vld [vmem:[#allocation2 + $0x38] sm:$0xff]
    %v38 = vld [vmem:[#allocation2 + $0x40] sm:$0xff]
    %v39 = vld [vmem:[#allocation2 + $0x48] sm:$0xff]
    %v40 = vld [vmem:[#allocation2 + $0x50] sm:$0xff]
    %v41 = vld [vmem:[#allocation2 + $0x58] sm:$0xff]
    %v42 = vld [vmem:[#allocation2 + $0x60] sm:$0xff]
    %v43 = vld [vmem:[#allocation2 + $0x68] sm:$0xff]
    %v44 = vld [vmem:[#allocation2 + $0x70] sm:$0xff]
    %v45 = vld [vmem:[#allocation2 + $0x78] sm:$0xff]
    %v46 = vld [vmem:[#allocation2 + $0x80] sm:$0xff]
    %v47 = vld [vmem:[#allocation2 + $0x88] sm:$0xff]
    %v48 = vld [vmem:[#allocation2 + $0x90] sm:$0xff]
    %v49 = vld [vmem:[#allocation2 + $0x98] sm:$0xff]
    %v50 = vld [vmem:[#allocation2 + $0xa0] sm:$0xff]
    %v51 = vld [vmem:[#allocation2 + $0xa8] sm:$0xff]
    %v52 = vld [vmem:[#allocation2 + $0xb0] sm:$0xff]
    %v53 = vld [vmem:[#allocation2 + $0xb8] sm:$0xff]
    %v54 = vld [vmem:[#allocation2 + $0xc0] sm:$0xff]
    %v55 = vld [vmem:[#allocation2 + $0xc8] sm:$0xff]
    %v56 = vld [vmem:[#allocation2 + $0xd0] sm:$0xff]
    %v57 = vld [vmem:[#allocation2 + $0xd8] sm:$0xff]
    %v58 = vld [vmem:[#allocation2 + $0xe0] sm:$0xff]
    %v59 = vld [vmem:[#allocation2 + $0xe8] sm:$0xff]
    %v60 = vld [vmem:[#allocation2 + $0xf0] sm:$0xff]
    %v61 = vld [vmem:[#allocation2 + $0xf8] sm:$0xff]
    %v62 = vld [vmem:[#allocation2 + $0x100] sm:$0xff]
    %v63 = vld [vmem:[#allocation2 + $0x108] sm:$0xff]
    %v64 = vld [vmem:[#allocation2 + $0x110] sm:$0xff]
    %v65 = vld [vmem:[#allocation2 + $0x118] sm:$0xff]
    %v66 = vld [vmem:[#allocation2 + $0x120] sm:$0xff]
    %v67 = vld [vmem:[#allocation2 + $0x128] sm:$0xff]
    %v68 = vld [vmem:[#allocation2 + $0x130] sm:$0xff]
    %v69 = vld [vmem:[#allocation2 + $0x138] sm:$0xff]
    %v70 = vld [vmem:[#allocation2 + $0x140] sm:$0xff]
    %v71 = vld [vmem:[#allocation2 + $0x148] sm:$0xff]
    %v72 = vld [vmem:[#allocation2 + $0x150] sm:$0xff]
    %v73 = vld [vmem:[#allocation2 + $0x158] sm:$0xff]
    %v74 = vld [vmem:[#allocation2 + $0x160] sm:$0xff]
    %v75 = vld [vmem:[#allocation2 + $0x168] sm:$0xff]
    %v76 = vld [vmem:[#allocation2 + $0x170] sm:$0xff]
    %v77 = vld [vmem:[#allocation2 + $0x178] sm:$0xff]
    %v78 = vld [vmem:[#allocation2 + $0x180] sm:$0xff]
    %v79 = vld [vmem:[#allocation2 + $0x188] sm:$0xff]
    %v80 = vld [vmem:[#allocation2 + $0x190] sm:$0xff]
    %v81 = vld [vmem:[#allocation2 + $0x198] sm:$0xff]
    %v82 = vld [vmem:[#allocation2 + $0x1a0] sm:$0xff]
    %v83 = vld [vmem:[#allocation2 + $0x1a8] sm:$0xff]
    %v84 = vld [vmem:[#allocation2 + $0x1b0] sm:$0xff]
    %v85 = vld [vmem:[#allocation2 + $0x1b8] sm:$0xff]
    %v86 = vld [vmem:[#allocation2 + $0x1c0] sm:$0xff]
    %v87 = vld [vmem:[#allocation2 + $0x1c8] sm:$0xff]
    %v88 = vld [vmem:[#allocation2 + $0x1d0] sm:$0xff]
    %v89 = vld [vmem:[#allocation2 + $0x1d8] sm:$0xff]
    %v90 = vld [vmem:[#allocation2 + $0x1e0] sm:$0xff]
    %v91 = vld [vmem:[#allocation2 + $0x1e8] sm:$0xff]
    %v92 = vld [vmem:[#allocation2 + $0x1f0] sm:$0xff]
    %v93 = vld [vmem:[#allocation2 + $0x1f8] sm:$0xff]
    %v94 = vld [vmem:[#allocation2 + $0x200] sm:$0xff]
    %v95 = vld [vmem:[#allocation2 + $0x208] sm:$0xff]
    %v96 = vld [vmem:[#allocation2 + $0x210] sm:$0xff]
    %v97 = vld [vmem:[#allocation2 + $0x218] sm:$0xff]
    %v98 = vld [vmem:[#allocation2 + $0x220] sm:$0xff]
    %v99 = vld [vmem:[#allocation2 + $0x228] sm:$0xff]
    %v100 = vld [vmem:[#allocation2 + $0x230] sm:$0xff]
    %v101 = vld [vmem:[#allocation2 + $0x238] sm:$0xff]
    %v102 = vld [vmem:[#allocation2 + $0x240] sm:$0xff]
    %v103 = vld [vmem:[#allocation2 + $0x248] sm:$0xff]
    %v104 = vld [vmem:[#allocation2 + $0x250] sm:$0xff]
    %v105 = vld [vmem:[#allocation2 + $0x258] sm:$0xff]
    %v106 = vld [vmem:[#allocation2 + $0x260] sm:$0xff]
    %v107 = vld [vmem:[#allocation2 + $0x268] sm:$0xff]
    %v108 = vld [vmem:[#allocation2 + $0x270] sm:$0xff]
    %v109 = vld [vmem:[#allocation2 + $0x278] sm:$0xff]
    %v110 = vld [vmem:[#allocation2 + $0x280] sm:$0xff]
    %v111 = vld [vmem:[#allocation2 + $0x288] sm:$0xff]
    %v112 = vld [vmem:[#allocation2 + $0x290] sm:$0xff]
    %v113 = vld [vmem:[#allocation2 + $0x298] sm:$0xff]
    %v114 = vld [vmem:[#allocation2 + $0x2a0] sm:$0xff]
    %v115 = vld [vmem:[#allocation2 + $0x2a8] sm:$0xff]
    %v116 = vld [vmem:[#allocation2 + $0x2b0] sm:$0xff]
    %v117 = vld [vmem:[#allocation2 + $0x2b8] sm:$0xff]
    %v118 = vld [vmem:[#allocation2 + $0x2c0] sm:$0xff]
    %v119 = vld [vmem:[#allocation2 + $0x2c8] sm:$0xff]
    %v120 = vld [vmem:[#allocation2 + $0x2d0] sm:$0xff]
    %v121 = vld [vmem:[#allocation2 + $0x2d8] sm:$0xff]
    %v122 = vld [vmem:[#allocation2 + $0x2e0] sm:$0xff]
    %v123 = vld [vmem:[#allocation2 + $0x2e8] sm:$0xff]
    %v124 = vld [vmem:[#allocation2 + $0x2f0] sm:$0xff]
    %v125 = vld [vmem:[#allocation2 + $0x2f8] sm:$0xff]
    %v126 = vld [vmem:[#allocation2 + $0x300] sm:$0xff]
    %v127 = vld [vmem:[#allocation2 + $0x308] sm:$0xff]
    %v128 = vld [vmem:[#allocation2 + $0x310] sm:$0xff]
    %v129 = vld [vmem:[#allocation2 + $0x318] sm:$0xff]
    %v130 = vld [vmem:[#allocation2 + $0x320] sm:$0xff]
    %v131 = vld [vmem:[#allocation2 + $0x328] sm:$0xff]
    %v132 = vld [vmem:[#allocation2 + $0x330] sm:$0xff]
    %v133 = vld [vmem:[#allocation2 + $0x338] sm:$0xff]
    %v134 = vld [vmem:[#allocation2 + $0x340] sm:$0xff]
    %v135 = vld [vmem:[#allocation2 + $0x348] sm:$0xff]
    %v136 = vld [vmem:[#allocation2 + $0x350] sm:$0xff]
    %v137 = vld [vmem:[#allocation2 + $0x358] sm:$0xff]
    %v138 = vld [vmem:[#allocation2 + $0x360] sm:$0xff]
    %v139 = vld [vmem:[#allocation2 + $0x368] sm:$0xff]
    %v140 = vld [vmem:[#allocation2 + $0x370] sm:$0xff]
    %v141 = vld [vmem:[#allocation2 + $0x378] sm:$0xff]
    %v142 = vld [vmem:[#allocation2 + $0x380] sm:$0xff]
    %v143 = vld [vmem:[#allocation2 + $0x388] sm:$0xff]
    %v144 = vld [vmem:[#allocation2 + $0x390] sm:$0xff]
    %v145 = vld [vmem:[#allocation2 + $0x398] sm:$0xff]
    %v146 = vld [vmem:[#allocation2 + $0x3a0] sm:$0xff]
    %v147 = vld [vmem:[#allocation2 + $0x3a8] sm:$0xff]
    %v148 = vld [vmem:[#allocation2 + $0x3b0] sm:$0xff]
    %v149 = vld [vmem:[#allocation2 + $0x3b8] sm:$0xff]
    %v150 = vld [vmem:[#allocation2 + $0x3c0] sm:$0xff]
    %v151 = vld [vmem:[#allocation2 + $0x3c8] sm:$0xff]
    %v152 = vld [vmem:[#allocation2 + $0x3d0] sm:$0xff]
    %v153 = vld [vmem:[#allocation2 + $0x3d8] sm:$0xff]
    %v154 = vld [vmem:[#allocation2 + $0x3e0] sm:$0xff]
    %v155 = vld [vmem:[#allocation2 + $0x3e8] sm:$0xff]
    %v156 = vld [vmem:[#allocation2 + $0x3f0] sm:$0xff]
    %v157 = vld [vmem:[#allocation2 + $0x3f8] sm:$0xff]
    %v158 = vld [vmem:[%s2] sm:$0xff]
    %160 = vset.pattern.permute.xlu0 0
    %161 = vperm.xlu0 %160, %v158
    %v162 = vpop.permute.xlu0 %161
    %164 = vmatprep.subr.mxu0 0.0
    %165 = vmatpush1.xpose.msra.mxu0 %v30
    %166 = vmatprep.subr.mxu0 0.0
    %167 = vmatpush1.xpose.msra.mxu0 %v31
    %168 = vmatprep.subr.mxu0 0.0
    %169 = vmatpush1.xpose.msra.mxu0 %v32
    %170 = vmatprep.subr.mxu0 0.0
    %171 = vmatpush1.xpose.msra.mxu0 %v33
    %172 = vmatprep.subr.mxu0 0.0
    %173 = vmatpush1.xpose.msra.mxu0 %v34
    %174 = vmatprep.subr.mxu0 0.0
    %175 = vmatpush1.xpose.msra.mxu0 %v35
    %176 = vmatprep.subr.mxu0 0.0
    %177 = vmatpush1.xpose.msra.mxu0 %v36
    %178 = vmatprep.subr.mxu0 0.0
    %179 = vmatpush1.xpose.msra.mxu0 %v37
    %180 = vmatprep.subr.mxu0 0.0
    %181 = vmatpush1.xpose.msra.mxu0 %v38
    %182 = vmatprep.subr.mxu0 0.0
    %183 = vmatpush1.xpose.msra.mxu0 %v39
    %184 = vmatprep.subr.mxu0 0.0
    %185 = vmatpush1.xpose.msra.mxu0 %v40
    %186 = vmatprep.subr.mxu0 0.0
    %187 = vmatpush1.xpose.msra.mxu0 %v41
    %188 = vmatprep.subr.mxu0 0.0
    %189 = vmatpush1.xpose.msra.mxu0 %v42
    %190 = vmatprep.subr.mxu0 0.0
    %191 = vmatpush1.xpose.msra.mxu0 %v43
    %192 = vmatprep.subr.mxu0 0.0
    %193 = vmatpush1.xpose.msra.mxu0 %v44
    %194 = vmatprep.subr.mxu0 0.0
    %195 = vmatpush1.xpose.msra.mxu0 %v45
    %196 = vmatprep.subr.mxu0 0.0
    %197 = vmatpush1.xpose.msra.mxu0 %v46
    %198 = vmatprep.subr.mxu0 0.0
    %199 = vmatpush1.xpose.msra.mxu0 %v47
    %200 = vmatprep.subr.mxu0 0.0
    %201 = vmatpush1.xpose.msra.mxu0 %v48
    %202 = vmatprep.subr.mxu0 0.0
    %203 = vmatpush1.xpose.msra.mxu0 %v49
    %204 = vmatprep.subr.mxu0 0.0
    %205 = vmatpush1.xpose.msra.mxu0 %v50
    %206 = vmatprep.subr.mxu0 0.0
    %207 = vmatpush1.xpose.msra.mxu0 %v51
    %208 = vmatprep.subr.mxu0 0.0
    %209 = vmatpush1.xpose.msra.mxu0 %v52
    %210 = vmatprep.subr.mxu0 0.0
    %211 = vmatpush1.xpose.msra.mxu0 %v53
    %212 = vmatprep.subr.mxu0 0.0
    %213 = vmatpush1.xpose.msra.mxu0 %v54
    %214 = vmatprep.subr.mxu0 0.0
    %215 = vmatpush1.xpose.msra.mxu0 %v55
    %216 = vmatprep.subr.mxu0 0.0
    %217 = vmatpush1.xpose.msra.mxu0 %v56
    %218 = vmatprep.subr.mxu0 0.0
    %219 = vmatpush1.xpose.msra.mxu0 %v57
    %220 = vmatprep.subr.mxu0 0.0
    %221 = vmatpush1.xpose.msra.mxu0 %v58
    %222 = vmatprep.subr.mxu0 0.0
    %223 = vmatpush1.xpose.msra.mxu0 %v59
    %224 = vmatprep.subr.mxu0 0.0
    %225 = vmatpush1.xpose.msra.mxu0 %v60
    %226 = vmatprep.subr.mxu0 0.0
    %227 = vmatpush1.xpose.msra.mxu0 %v61
    %228 = vmatprep.mubr.f32.mxu0 0.0
    %229 = vmatmul.mubr.f32.gmra.mrb[0].mxu0 %v29
    %v230 = vpop.f32.mrb[0].mxu0
    %v231 = vadd.f32 %v162, %v230
    %v232 = vpop.f32.mrb[0].mxu0
    %v233 = vadd.f32 %v162, %v232
    %234 = vdwg.mxu0
    %235 = vmatprep.subr.mxu0 0.0
    %236 = vmatpush1.xpose.msra.mxu0 %v62
    %237 = vmatprep.subr.mxu0 0.0
    %238 = vmatpush1.xpose.msra.mxu0 %v63
    %239 = vmatprep.subr.mxu0 0.0
    %240 = vmatpush1.xpose.msra.mxu0 %v64
    %241 = vmatprep.subr.mxu0 0.0
    %242 = vmatpush1.xpose.msra.mxu0 %v65
    %243 = vmatprep.subr.mxu0 0.0
    %244 = vmatpush1.xpose.msra.mxu0 %v66
    %245 = vmatprep.subr.mxu0 0.0
    %246 = vmatpush1.xpose.msra.mxu0 %v67
    %247 = vmatprep.subr.mxu0 0.0
    %248 = vmatpush1.xpose.msra.mxu0 %v68
    %249 = vmatprep.subr.mxu0 0.0
    %250 = vmatpush1.xpose.msra.mxu0 %v69
    %251 = vmatprep.subr.mxu0 0.0
    %252 = vmatpush1.xpose.msra.mxu0 %v70
    %253 = vmatprep.subr.mxu0 0.0
    %254 = vmatpush1.xpose.msra.mxu0 %v71
    %255 = vmatprep.subr.mxu0 0.0
    %256 = vmatpush1.xpose.msra.mxu0 %v72
    %257 = vmatprep.subr.mxu0 0.0
    %258 = vmatpush1.xpose.msra.mxu0 %v73
    %259 = vmatprep.subr.mxu0 0.0
    %260 = vmatpush1.xpose.msra.mxu0 %v74
    %261 = vmatprep.subr.mxu0 0.0
    %262 = vmatpush1.xpose.msra.mxu0 %v75
    %263 = vmatprep.subr.mxu0 0.0
    %264 = vmatpush1.xpose.msra.mxu0 %v76
    %265 = vmatprep.subr.mxu0 0.0
    %266 = vmatpush1.xpose.msra.mxu0 %v77
    %267 = vmatprep.subr.mxu0 0.0
    %268 = vmatpush1.xpose.msra.mxu0 %v78
    %269 = vmatprep.subr.mxu0 0.0
    %270 = vmatpush1.xpose.msra.mxu0 %v79
    %271 = vmatprep.subr.mxu0 0.0
    %272 = vmatpush1.xpose.msra.mxu0 %v80
    %273 = vmatprep.subr.mxu0 0.0
    %274 = vmatpush1.xpose.msra.mxu0 %v81
    %275 = vmatprep.subr.mxu0 0.0
    %276 = vmatpush1.xpose.msra.mxu0 %v82
    %277 = vmatprep.subr.mxu0 0.0
    %278 = vmatpush1.xpose.msra.mxu0 %v83
    %279 = vmatprep.subr.mxu0 0.0
    %280 = vmatpush1.xpose.msra.mxu0 %v84
    %281 = vmatprep.subr.mxu0 0.0
    %282 = vmatpush1.xpose.msra.mxu0 %v85
    %283 = vmatprep.subr.mxu0 0.0
    %284 = vmatpush1.xpose.msra.mxu0 %v86
    %285 = vmatprep.subr.mxu0 0.0
    %286 = vmatpush1.xpose.msra.mxu0 %v87
    %287 = vmatprep.subr.mxu0 0.0
    %288 = vmatpush1.xpose.msra.mxu0 %v88
    %289 = vmatprep.subr.mxu0 0.0
    %290 = vmatpush1.xpose.msra.mxu0 %v89
    %291 = vmatprep.subr.mxu0 0.0
    %292 = vmatpush1.xpose.msra.mxu0 %v90
    %293 = vmatprep.subr.mxu0 0.0
    %294 = vmatpush1.xpose.msra.mxu0 %v91
    %295 = vmatprep.subr.mxu0 0.0
    %296 = vmatpush1.xpose.msra.mxu0 %v92
    %297 = vmatprep.subr.mxu0 0.0
    %298 = vmatpush1.xpose.msra.mxu0 %v93
    %299 = vmatprep.mubr.f32.mxu0 0.0
    %300 = vmatmul.mubr.f32.gmra.mrb[0].mxu0 %v29
    %v301 = vpop.f32.mrb[0].mxu0
    %v302 = vadd.f32 %v162, %v301
    %v303 = vpop.f32.mrb[0].mxu0
    %v304 = vadd.f32 %v162, %v303
    %305 = vdwg.mxu0
    %306 = vmatprep.subr.mxu0 0.0
    %307 = vmatpush1.xpose.msra.mxu0 %v94
    %308 = vmatprep.subr.mxu0 0.0
    %309 = vmatpush1.xpose.msra.mxu0 %v95
    %310 = vmatprep.subr.mxu0 0.0
    %311 = vmatpush1.xpose.msra.mxu0 %v96
    %312 = vmatprep.subr.mxu0 0.0
    %313 = vmatpush1.xpose.msra.mxu0 %v97
    %314 = vmatprep.subr.mxu0 0.0
    %315 = vmatpush1.xpose.msra.mxu0 %v98
    %316 = vmatprep.subr.mxu0 0.0
    %317 = vmatpush1.xpose.msra.mxu0 %v99
    %318 = vmatprep.subr.mxu0 0.0
    %319 = vmatpush1.xpose.msra.mxu0 %v100
    %320 = vmatprep.subr.mxu0 0.0
    %321 = vmatpush1.xpose.msra.mxu0 %v101
    %322 = vmatprep.subr.mxu0 0.0
    %323 = vmatpush1.xpose.msra.mxu0 %v102
    %324 = vmatprep.subr.mxu0 0.0
    %325 = vmatpush1.xpose.msra.mxu0 %v103
    %326 = vmatprep.subr.mxu0 0.0
    %327 = vmatpush1.xpose.msra.mxu0 %v104
    %328 = vmatprep.subr.mxu0 0.0
    %329 = vmatpush1.xpose.msra.mxu0 %v105
    %330 = vmatprep.subr.mxu0 0.0
    %331 = vmatpush1.xpose.msra.mxu0 %v106
    %332 = vmatprep.subr.mxu0 0.0
    %333 = vmatpush1.xpose.msra.mxu0 %v107
    %334 = vmatprep.subr.mxu0 0.0
    %335 = vmatpush1.xpose.msra.mxu0 %v108
    %336 = vmatprep.subr.mxu0 0.0
    %337 = vmatpush1.xpose.msra.mxu0 %v109
    %338 = vmatprep.subr.mxu0 0.0
    %339 = vmatpush1.xpose.msra.mxu0 %v110
    %340 = vmatprep.subr.mxu0 0.0
    %341 = vmatpush1.xpose.msra.mxu0 %v111
    %342 = vmatprep.subr.mxu0 0.0
    %343 = vmatpush1.xpose.msra.mxu0 %v112
    %344 = vmatprep.subr.mxu0 0.0
    %345 = vmatpush1.xpose.msra.mxu0 %v113
    %346 = vmatprep.subr.mxu0 0.0
    %347 = vmatpush1.xpose.msra.mxu0 %v114
    %348 = vmatprep.subr.mxu0 0.0
    %349 = vmatpush1.xpose.msra.mxu0 %v115
    %350 = vmatprep.subr.mxu0 0.0
    %351 = vmatpush1.xpose.msra.mxu0 %v116
    %352 = vmatprep.subr.mxu0 0.0
    %353 = vmatpush1.xpose.msra.mxu0 %v117
    %354 = vmatprep.subr.mxu0 0.0
    %355 = vmatpush1.xpose.msra.mxu0 %v118
    %356 = vmatprep.subr.mxu0 0.0
    %357 = vmatpush1.xpose.msra.mxu0 %v119
    %358 = vmatprep.subr.mxu0 0.0
    %359 = vmatpush1.xpose.msra.mxu0 %v120
    %360 = vmatprep.subr.mxu0 0.0
    %361 = vmatpush1.xpose.msra.mxu0 %v121
    %362 = vmatprep.subr.mxu0 0.0
    %363 = vmatpush1.xpose.msra.mxu0 %v122
    %364 = vmatprep.subr.mxu0 0.0
    %365 = vmatpush1.xpose.msra.mxu0 %v123
    %366 = vmatprep.subr.mxu0 0.0
    %367 = vmatpush1.xpose.msra.mxu0 %v124
    %368 = vmatprep.subr.mxu0 0.0
    %369 = vmatpush1.xpose.msra.mxu0 %v125
    %370 = vmatprep.mubr.f32.mxu0 0.0
    %371 = vmatmul.mubr.f32.gmra.mrb[0].mxu0 %v29
    %v372 = vpop.f32.mrb[0].mxu0
    %v373 = vadd.f32 %v162, %v372
    %v374 = vpop.f32.mrb[0].mxu0
    %v375 = vadd.f32 %v162, %v374
    %376 = vdwg.mxu0
    %377 = vmatprep.subr.mxu0 0.0
    %378 = vmatpush1.xpose.msra.mxu0 %v126
    %379 = vmatprep.subr.mxu0 0.0
    %380 = vmatpush1.xpose.msra.mxu0 %v127
    %381 = vmatprep.subr.mxu0 0.0
    %382 = vmatpush1.xpose.msra.mxu0 %v128
    %383 = vmatprep.subr.mxu0 0.0
    %384 = vmatpush1.xpose.msra.mxu0 %v129
    %385 = vmatprep.subr.mxu0 0.0
    %386 = vmatpush1.xpose.msra.mxu0 %v130
    %387 = vmatprep.subr.mxu0 0.0
    %388 = vmatpush1.xpose.msra.mxu0 %v131
    %389 = vmatprep.subr.mxu0 0.0
    %390 = vmatpush1.xpose.msra.mxu0 %v132
    %391 = vmatprep.subr.mxu0 0.0
    %392 = vmatpush1.xpose.msra.mxu0 %v133
    %393 = vmatprep.subr.mxu0 0.0
    %394 = vmatpush1.xpose.msra.mxu0 %v134
    %395 = vmatprep.subr.mxu0 0.0
    %396 = vmatpush1.xpose.msra.mxu0 %v135
    %397 = vmatprep.subr.mxu0 0.0
    %398 = vmatpush1.xpose.msra.mxu0 %v136
    %399 = vmatprep.subr.mxu0 0.0
    %400 = vmatpush1.xpose.msra.mxu0 %v137
    %401 = vmatprep.subr.mxu0 0.0
    %402 = vmatpush1.xpose.msra.mxu0 %v138
    %403 = vmatprep.subr.mxu0 0.0
    %404 = vmatpush1.xpose.msra.mxu0 %v139
    %405 = vmatprep.subr.mxu0 0.0
    %406 = vmatpush1.xpose.msra.mxu0 %v140
    %407 = vmatprep.subr.mxu0 0.0
    %408 = vmatpush1.xpose.msra.mxu0 %v141
    %409 = vmatprep.subr.mxu0 0.0
    %410 = vmatpush1.xpose.msra.mxu0 %v142
    %411 = vmatprep.subr.mxu0 0.0
    %412 = vmatpush1.xpose.msra.mxu0 %v143
    %413 = vmatprep.subr.mxu0 0.0
    %414 = vmatpush1.xpose.msra.mxu0 %v144
    %415 = vmatprep.subr.mxu0 0.0
    %416 = vmatpush1.xpose.msra.mxu0 %v145
    %417 = vmatprep.subr.mxu0 0.0
    %418 = vmatpush1.xpose.msra.mxu0 %v146
    %419 = vmatprep.subr.mxu0 0.0
    %420 = vmatpush1.xpose.msra.mxu0 %v147
    %421 = vmatprep.subr.mxu0 0.0
    %422 = vmatpush1.xpose.msra.mxu0 %v148
    %423 = vmatprep.subr.mxu0 0.0
    %424 = vmatpush1.xpose.msra.mxu0 %v149
    %425 = vmatprep.subr.mxu0 0.0
    %426 = vmatpush1.xpose.msra.mxu0 %v150
    %427 = vmatprep.subr.mxu0 0.0
    %428 = vmatpush1.xpose.msra.mxu0 %v151
    %429 = vmatprep.subr.mxu0 0.0
    %430 = vmatpush1.xpose.msra.mxu0 %v152
    %431 = vmatprep.subr.mxu0 0.0
    %432 = vmatpush1.xpose.msra.mxu0 %v153
    %433 = vmatprep.subr.mxu0 0.0
    %434 = vmatpush1.xpose.msra.mxu0 %v154
    %435 = vmatprep.subr.mxu0 0.0
    %436 = vmatpush1.xpose.msra.mxu0 %v155
    %437 = vmatprep.subr.mxu0 0.0
    %438 = vmatpush1.xpose.msra.mxu0 %v156
    %439 = vmatprep.subr.mxu0 0.0
    %440 = vmatpush1.xpose.msra.mxu0 %v157
    %441 = vmatprep.mubr.f32.mxu0 0.0
    %442 = vmatmul.mubr.f32.gmra.mrb[0].mxu0 %v29
    %v443 = vpop.f32.mrb[0].mxu0
    %v444 = vadd.f32 %v162, %v443
    %v445 = vpop.f32.mrb[0].mxu0
    %v446 = vadd.f32 %v162, %v445
    %447 = vdwg.mxu0
    %448 = vst [vmem:[#allocation5] sm:$0xff] %v231
    %449 = vst [vmem:[#allocation5 + $0x8] sm:$0xff] %v233
    %450 = vst [vmem:[#allocation5 + $0x10] sm:$0xff] %v302
    %451 = vst [vmem:[#allocation5 + $0x18] sm:$0xff] %v304
    %452 = vst [vmem:[#allocation5 + $0x20] sm:$0xff] %v373
    %453 = vst [vmem:[#allocation5 + $0x28] sm:$0xff] %v375
    %454 = vst [vmem:[#allocation5 + $0x30] sm:$0xff] %v444
    %455 = vst [vmem:[#allocation5 + $0x38] sm:$0xff] %v446
    // Predicated region
    $region18: #{tpu_custom_call.1} parent=1 // pred_check
      _
    $region19: #{tpu_custom_call.1} parent=1 // pred_check_branch
      %457 = sbr.rel (0) target = $region21
    $region20: #{tpu_custom_call.1} parent=1 // pred_region
      %s459 = ssub.s32 1024, 128
      %460 = vsyncadd [#allocation4], %s459
      %s462 = sshll.u32 [#allocation5], 4
      %s463 = int_to_ptr.vmem [resolvable:$true] %s462
      %465 = dma.vmem_to_hbm [thread:$0]  %s463, 128, %s3, [#allocation4]
    $region21: #{tpu_custom_call.1} parent=1 // pred_fallthru
      _
    // Predicated region
    $region22: #{tpu_custom_call.1} parent=1 // pred_check
      _
    $region23: #{tpu_custom_call.1} parent=1 // pred_check_branch
      %467 = sbr.rel (0) target = $region25
    $region24: #{tpu_custom_call.1} parent=1 // pred_region
      %468 = dma.done [#allocation4], 1024
    $region25: #{tpu_custom_call.1} parent=1 // pred_fallthru
      _
    %469 = vsyncpa [#allocation3], 1
    %470 = vsyncpa [#allocation4], 1

</llo_original>
